<compile_context>
chip_gen: v7x
topology: tpu7x:2x2x1
jax: 0.10.0
libtpu: 0.0.40
codegen_flags: <defaults>
</compile_context>

<pallas_src>
import jax
import jax.numpy as jnp
from jax.experimental import pallas as pl
from jax.experimental.pallas import tpu as pltpu


def _lincomb_kernel(x_ref, w_ref, b_ref, o_ref):
    # x_ref: [tR, c*d], w_ref: [c*d, c], b_ref: [1, c], o_ref: [tR, c]
    acc = jnp.dot(x_ref[...], w_ref[...], preferred_element_type=jnp.float32)
    acc = acc + b_ref[...].astype(jnp.float32)
    o_ref[...] = acc.astype(o_ref.dtype)


def _choose_row_tile(n_rows, cd, itemsize):
    # Target a ~4 MiB input block (double-buffered -> ~8 MiB), well under the
    # 32 MiB scoped VMEM default and v7x's 64 MiB physical VMEM.
    target_bytes = 4 * 1024 * 1024
    t = target_bytes // max(1, cd * itemsize)
    t = int(max(8, min(1024, t)))
    t = (t // 8) * 8                 # sublane-aligned
    if t >= n_rows:
        return n_rows                # full extent is always a legal block dim
    return t


def linear_combination(x, w, b):
    """x: [B, S, c, d], w: [c, d], b: [c] -> out: [B, S, c]"""
    B, S, c, d = x.shape
    R = B * S
    cd = c * d
    itemsize = jnp.dtype(x.dtype).itemsize

    # Lane-dense views: [R, c*d] input, block-diagonal [c*d, c] weight, [1, c] bias.
    x2 = x.reshape(R, cd)
    w_bd = (w[:, :, None] * jnp.eye(c, dtype=w.dtype)[:, None, :]).reshape(cd, c)
    b2 = b.reshape(1, c)

    tR = _choose_row_tile(R, cd, itemsize)
    grid = (pl.cdiv(R, tR),)

    out_dtype = x.dtype
    cost = pl.CostEstimate(
        flops=2 * R * cd,
        bytes_accessed=(R * cd * itemsize
                        + R * c * jnp.dtype(out_dtype).itemsize
                        + cd * c * jnp.dtype(w.dtype).itemsize
                        + c * jnp.dtype(b.dtype).itemsize),
        transcendentals=0,
    )

    out2 = pl.pallas_call(
        _lincomb_kernel,
        out_shape=jax.ShapeDtypeStruct((R, c), out_dtype),
        grid_spec=pltpu.PrefetchScalarGridSpec(
            num_scalar_prefetch=0,
            grid=grid,
            in_specs=[
                pl.BlockSpec((tR, cd), lambda i: (i, 0)),   # row tile of x
                pl.BlockSpec((cd, c), lambda i: (0, 0)),    # resident block-diag weight
                pl.BlockSpec((1, c), lambda i: (0, 0)),     # resident bias
            ],
            out_specs=pl.BlockSpec((tR, c), lambda i: (i, 0)),
        ),
        compiler_params=pltpu.CompilerParams(
            dimension_semantics=("parallel",),
            vmem_limit_bytes=32 * 1024 * 1024,
        ),
        cost_estimate=cost,
    )(x2, w_bd, b2)

    return out2.reshape(B, S, c)


if __name__ == "__main__":
    # Small shapes consistent with the module: c channels, d features (c*d = 128, lane-dense).
    B, S, c, d = 2, 8, 4, 32

    key = jax.random.PRNGKey(0)
    kx, kw, kb = jax.random.split(key, 3)

    x = jax.random.normal(kx, (B, S, c, d), dtype=jnp.float32)
    # Synthetic params: one Linear(d, 1) per channel, stacked as [c, d] / [c].
    bound = 1.0 / (d ** 0.5)
    w = jax.random.uniform(kw, (c, d), dtype=jnp.float32, minval=-bound, maxval=bound)
    b = jax.random.uniform(kb, (c,), dtype=jnp.float32, minval=-bound, maxval=bound)

    out = jax.block_until_ready(linear_combination(x, w, b))

    # Pure-JAX reference for semantics validation.
    ref = jnp.einsum("bsid,id->bsi", x, w) + b[None, None, :]
    assert out.shape == (B, S, c)
    assert jnp.allclose(out, ref, atol=1e-5, rtol=1e-5)

    print("KERNEL_OK")
</pallas_src>

<mosaic_0001>
module attributes {stable_mosaic.version = 11 : i64} {
  func.func @_lincomb_kernel(%arg0: i32, %arg1: memref<16x128xf32, #tpu.memory_space<vmem>>, %arg2: memref<128x4xf32, #tpu.memory_space<vmem>>, %arg3: memref<1x4xf32, #tpu.memory_space<vmem>>, %arg4: memref<16x4xf32, #tpu.memory_space<vmem>>) attributes {dimension_semantics = [#tpu.dimension_semantics<parallel>], iteration_bounds = array<i64: 1>, scalar_prefetch = 0 : i64, scratch_operands = 0 : i64, tpu.core_type = #tpu.core_type<tc>, window_params = [{transform_indices = @transform_0, window_bounds = array<i64: 16, 128>}, {pipeline_mode = #tpu.pipeline_mode<synchronous>, transform_indices = @transform_1, window_bounds = array<i64: 128, 4>}, {pipeline_mode = #tpu.pipeline_mode<synchronous>, transform_indices = @transform_2, window_bounds = array<i64: 1, 4>}, {transform_indices = @transform_3, window_bounds = array<i64: 16, 4>}]} {
    %c0 = arith.constant 0 : index
    %c0_0 = arith.constant 0 : index
    %0 = vector.load %arg1[%c0, %c0_0] : memref<16x128xf32, #tpu.memory_space<vmem>>, vector<16x128xf32>
    %c0_1 = arith.constant 0 : index
    %c0_2 = arith.constant 0 : index
    %1 = vector.load %arg2[%c0_1, %c0_2] : memref<128x4xf32, #tpu.memory_space<vmem>>, vector<128x4xf32>
    %cst = arith.constant dense<0.000000e+00> : vector<16x4xf32>
    %2 = tpu.matmul %0, %1, %cst {dimension_numbers = #tpu.dot_dimension_numbers<[1], [0], [0], [1], [0, 0, 1, 1], [], []>} : vector<16x128xf32>, vector<128x4xf32>, vector<16x4xf32> -> vector<16x4xf32>
    %c0_3 = arith.constant 0 : index
    %c0_4 = arith.constant 0 : index
    %3 = vector.load %arg3[%c0_3, %c0_4] : memref<1x4xf32, #tpu.memory_space<vmem>>, vector<1x4xf32>
    %4 = vector.broadcast %3 : vector<1x4xf32> to vector<16x4xf32>
    %5 = arith.addf %2, %4 : vector<16x4xf32>
    %c0_5 = arith.constant 0 : index
    %c0_6 = arith.constant 0 : index
    %6 = vector.load %arg4[%c0_5, %c0_6] : memref<16x4xf32, #tpu.memory_space<vmem>>, vector<16x4xf32>
    tpu.vector_store %arg4[%c0_5, %c0_6], %5 {strides = array<i32>} : memref<16x4xf32, #tpu.memory_space<vmem>>, vector<16x4xf32>,
    return
  }
  func.func @transform_0(%arg0: i32) -> (i32, i32) {
    %c0_i32 = arith.constant 0 : i32
    %c0_i32_0 = arith.constant 0 : i32
    return %arg0, %c0_i32 : i32, i32
  }
  func.func @transform_1(%arg0: i32) -> (i32, i32) {
    %c0_i32 = arith.constant 0 : i32
    %c0_i32_0 = arith.constant 0 : i32
    %c0_i32_1 = arith.constant 0 : i32
    return %c0_i32, %c0_i32_0 : i32, i32
  }
  func.func @transform_2(%arg0: i32) -> (i32, i32) {
    %c0_i32 = arith.constant 0 : i32
    %c0_i32_0 = arith.constant 0 : i32
    %c0_i32_1 = arith.constant 0 : i32
    return %c0_i32, %c0_i32_0 : i32, i32
  }
  func.func @transform_3(%arg0: i32) -> (i32, i32) {
    %c0_i32 = arith.constant 0 : i32
    %c0_i32_0 = arith.constant 0 : i32
    return %arg0, %c0_i32 : i32, i32
  }
}

</mosaic_0001>

<llo_original>
// kernel: tpu_custom_call.1
$region0: #{tpu_custom_call.1}
  #allocation0 [shape = 'u32[]', space=smem, size = 0x4, offset = 0x4, fixed_abs, tag = 'smem constant byte address 0x4 - core index']
  #allocation1 [shape = 'u32[144,128]{1,0:T(1,128)}', space=vmem, size = 0x12000, scoped, tag = 'internal scratch']
  %s0 = inlined_call_operand.vmem [shape: f32[16,128], index: 0, kind: input, shape index: {}]
  %s1 = inlined_call_operand.vmem [shape: f32[128,4], index: 1, kind: input, shape index: {}]
  %s2 = inlined_call_operand.vmem [shape: f32[1,4], index: 2, kind: input, shape index: {}]
  %s3 = inlined_call_operand.vmem [shape: f32[16,4], index: 3, kind: output, shape index: {}]
  %s4 = sld [smem:[#allocation0]]
  $region22: #{tpu_custom_call.1} parent=0
    _
  %s6 = ssub.s32 1, %s4
  %s7 = scalar_select 0, %s6, %s4
  // Predicated region
  $region2: #{tpu_custom_call.1} parent=0 // pred_check
    _
  $region3: #{tpu_custom_call.1} parent=0 // pred_check_branch
    %9 = sbr.rel (0) target = $region5
  $region4: #{tpu_custom_call.1} parent=0 // pred_region
    _
  $region5: #{tpu_custom_call.1} parent=0 // pred_fallthru
    _
  // Predicated region
  $region6: #{tpu_custom_call.1} parent=0 // pred_check
    _
  $region7: #{tpu_custom_call.1} parent=0 // pred_check_branch
    %11 = sbr.rel (0) target = $region9
  $region8: #{tpu_custom_call.1} parent=0 // pred_region
    _
  $region9: #{tpu_custom_call.1} parent=0 // pred_fallthru
    _
  // Predicated region
  $region10: #{tpu_custom_call.1} parent=0 // pred_check
    _
  $region11: #{tpu_custom_call.1} parent=0 // pred_check_branch
    %13 = sbr.rel (0) target = $region13
  $region12: #{tpu_custom_call.1} parent=0 // pred_region
    _
  $region13: #{tpu_custom_call.1} parent=0 // pred_fallthru
    _
  %v14 = vld [vmem:[%s0] sm:$0xff]
  %v15 = vld [vmem:[%s0 + $0x8] sm:$0xff]
  %v16 = vld [vmem:[%s1] sm:$0xff]
  %v17 = vld [vmem:[%s1 + $0x8] sm:$0xff]
  %v18 = vld [vmem:[%s1 + $0x10] sm:$0xff]
  %v19 = vld [vmem:[%s1 + $0x18] sm:$0xff]
  %v20 = vld [vmem:[%s1 + $0x20] sm:$0xff]
  %v21 = vld [vmem:[%s1 + $0x28] sm:$0xff]
  %v22 = vld [vmem:[%s1 + $0x30] sm:$0xff]
  %v23 = vld [vmem:[%s1 + $0x38] sm:$0xff]
  %v24 = vld [vmem:[%s1 + $0x40] sm:$0xff]
  %v25 = vld [vmem:[%s1 + $0x48] sm:$0xff]
  %v26 = vld [vmem:[%s1 + $0x50] sm:$0xff]
  %v27 = vld [vmem:[%s1 + $0x58] sm:$0xff]
  %v28 = vld [vmem:[%s1 + $0x60] sm:$0xff]
  %v29 = vld [vmem:[%s1 + $0x68] sm:$0xff]
  %v30 = vld [vmem:[%s1 + $0x70] sm:$0xff]
  %v31 = vld [vmem:[%s1 + $0x78] sm:$0xff]
  %v32 = vld [vmem:[%s2] sm:$0x1]
  %v34 = vlaneseq
  %v35 = vshrl.u32 %v34, 7
  %v36 = vsub.s32 0, %v35
  %v37 = vrot.slane %v32, %v36
  %39 = vmatprep.subr.mxu0 0.0
  %40 = vmatpush1.msra.mxu0 %v16
  %41 = vmatprep.subr.mxu0 0.0
  %42 = vmatpush1.msra.mxu0 %v17
  %43 = vmatprep.subr.mxu0 0.0
  %44 = vmatpush1.msra.mxu0 %v18
  %45 = vmatprep.subr.mxu0 0.0
  %46 = vmatpush1.msra.mxu0 %v19
  %47 = vmatprep.subr.mxu0 0.0
  %48 = vmatpush1.msra.mxu0 %v20
  %49 = vmatprep.subr.mxu0 0.0
  %50 = vmatpush1.msra.mxu0 %v21
  %51 = vmatprep.subr.mxu0 0.0
  %52 = vmatpush1.msra.mxu0 %v22
  %53 = vmatprep.subr.mxu0 0.0
  %54 = vmatpush1.msra.mxu0 %v23
  %55 = vmatprep.subr.mxu0 0.0
  %56 = vmatpush1.msra.mxu0 %v24
  %57 = vmatprep.subr.mxu0 0.0
  %58 = vmatpush1.msra.mxu0 %v25
  %59 = vmatprep.subr.mxu0 0.0
  %60 = vmatpush1.msra.mxu0 %v26
  %61 = vmatprep.subr.mxu0 0.0
  %62 = vmatpush1.msra.mxu0 %v27
  %63 = vmatprep.subr.mxu0 0.0
  %64 = vmatpush1.msra.mxu0 %v28
  %65 = vmatprep.subr.mxu0 0.0
  %66 = vmatpush1.msra.mxu0 %v29
  %67 = vmatprep.subr.mxu0 0.0
  %68 = vmatpush1.msra.mxu0 %v30
  %69 = vmatprep.subr.mxu0 0.0
  %70 = vmatpush1.msra.mxu0 %v31
  %71 = vmatprep.subr.mxu0 0.0
  %72 = vmatpush1.msra.mxu0 0.0
  %73 = vmatprep.subr.mxu0 0.0
  %74 = vmatpush1.msra.mxu0 0.0
  %75 = vmatprep.subr.mxu0 0.0
  %76 = vmatpush1.msra.mxu0 0.0
  %77 = vmatprep.subr.mxu0 0.0
  %78 = vmatpush1.msra.mxu0 0.0
  %79 = vmatprep.subr.mxu0 0.0
  %80 = vmatpush1.msra.mxu0 0.0
  %81 = vmatprep.subr.mxu0 0.0
  %82 = vmatpush1.msra.mxu0 0.0
  %83 = vmatprep.subr.mxu0 0.0
  %84 = vmatpush1.msra.mxu0 0.0
  %85 = vmatprep.subr.mxu0 0.0
  %86 = vmatpush1.msra.mxu0 0.0
  %87 = vmatprep.subr.mxu0 0.0
  %88 = vmatpush1.msra.mxu0 0.0
  %89 = vmatprep.subr.mxu0 0.0
  %90 = vmatpush1.msra.mxu0 0.0
  %91 = vmatprep.subr.mxu0 0.0
  %92 = vmatpush1.msra.mxu0 0.0
  %93 = vmatprep.subr.mxu0 0.0
  %94 = vmatpush1.msra.mxu0 0.0
  %95 = vmatprep.subr.mxu0 0.0
  %96 = vmatpush1.msra.mxu0 0.0
  %97 = vmatprep.subr.mxu0 0.0
  %98 = vmatpush1.msra.mxu0 0.0
  %99 = vmatprep.subr.mxu0 0.0
  %100 = vmatpush1.msra.mxu0 0.0
  %101 = vmatprep.subr.mxu0 0.0
  %102 = vmatpush1.msra.mxu0 0.0
  %103 = vmatprep.mubr.f32.mxu0 0.0
  %104 = vmatmul.mubr.f32.gmra.mrb[0].mxu0 %v14
  %v105 = vpop.f32.mrb[0].mxu0
  %v106 = vadd.f32 %v37, %v105
  %v107 = vpop.f32.mrb[0].mxu0
  %108 = vmatprep.mubr.f32.mxu0 0.0
  %109 = vmatmul.mubr.f32.gmra.mrb[0].mxu0 %v15
  %v110 = vpop.f32.mrb[0].mxu0
  %v111 = vadd.f32 %v37, %v110
  %v112 = vpop.f32.mrb[0].mxu0
  %113 = vdwg.mxu0
  %vm114 = vcmask 31744
  %115 = vst.msk [vmem:[%s3] sm:$0xff] %vm114, %v106
  %116 = vst.msk [vmem:[%s3 + $0x8] sm:$0xff] %vm114, %v111
  // Predicated region
  $region14: #{tpu_custom_call.1} parent=0 // pred_check
    _
  $region15: #{tpu_custom_call.1} parent=0 // pred_check_branch
    %118 = sbr.rel (0) target = $region17
  $region16: #{tpu_custom_call.1} parent=0 // pred_region
    _
  $region17: #{tpu_custom_call.1} parent=0 // pred_fallthru
    _
  // Predicated region
  $region18: #{tpu_custom_call.1} parent=0 // pred_check
    _
  $region19: #{tpu_custom_call.1} parent=0 // pred_check_branch
    %120 = sbr.rel (0) target = $region21
  $region20: #{tpu_custom_call.1} parent=0 // pred_region
    _
  $region21: #{tpu_custom_call.1} parent=0 // pred_fallthru
    _

</llo_original>
